<compile_context>
chip_gen: v7x
topology: tpu7x:2x2x1
jax: 0.10.0
libtpu: 0.0.40
codegen_flags: <defaults>
</compile_context>

<pallas_src>
import jax
import jax.numpy as jnp
from jax.experimental import pallas as pl
from jax.experimental.pallas import tpu as pltpu

FILTER_NUM = 32
INPUT_DIM = FILTER_NUM * 3      # 96, as in TDGraphDTA (input_dim = filter_num * 3)
PAD_DIM = 128                   # lane-dense padded feature dim
NUM_HEADS = 32                  # as in TDGraphDTA
HEAD_DIM = INPUT_DIM // NUM_HEADS
LN_EPS = 1e-5

# Precondition for the attn == v identity (per-head sequence length is 1).
assert NUM_HEADS * HEAD_DIM == INPUT_DIM
assert PAD_DIM >= INPUT_DIM + 1         # room for the constant-1 bias column


def _imha_kernel(x1_ref, x2_ref, w_ref, o_ref):
    # x1: (bb, 128) f32,        cols >= 96 are exactly zero.
    # x2: (bb, 128) mxu dtype,  col 96 == 1.0 (bias column), cols > 96 zero.
    # w : (3, 128, 128) mxu dtype, (in, out) layout, biases baked into row 96;
    #     pad cols zero except w[0][96,96] == w[1][96,96] == 1 so the 1-column
    #     propagates through h0 and h1 (but NOT h2, keeping LN stats exact).
    x1 = x1_ref[...]
    x2 = x2_ref[...]
    mxu_dt = x2.dtype

    # attention_output == value(x2): softmax over a size-1 key axis is 1.0.
    # value->fc fold + all bias adds are pre-baked into w.
    h0 = jnp.dot(x2, w_ref[0], preferred_element_type=jnp.float32)
    h1 = jnp.maximum(
        jnp.dot(h0.astype(mxu_dt), w_ref[1], preferred_element_type=jnp.float32), 0.0)
    h2 = jnp.maximum(
        jnp.dot(h1.astype(mxu_dt), w_ref[2], preferred_element_type=jnp.float32), 0.0)

    # residual + layer_norm over the 96 real features (no affine, eps=1e-5).
    # Pad columns of h2 and x1 are exactly zero, so summing over all 128 lanes
    # with a fixed 1/96 divisor yields the true statistics.  Single-pass
    # variance (E[y^2] - mean^2) is fine for O(1) LN inputs; max() guards
    # against tiny negative round-off.
    y = h2 + x1
    inv_d = 1.0 / INPUT_DIM
    mean = jnp.sum(y, axis=-1, keepdims=True) * inv_d
    mean_sq = jnp.sum(y * y, axis=-1, keepdims=True) * inv_d
    var = jnp.maximum(mean_sq - mean * mean, 0.0)
    o_ref[...] = ((y - mean) * jax.lax.rsqrt(var + LN_EPS)).astype(o_ref.dtype)


def prepare_params(params, *, mxu_dtype=jnp.bfloat16):
    """One-time host-side prep (call ONCE at init).

    * transpose torch Linear weights to (in, out) layout,
    * fold value -> fc into a single matrix,
    * fold every bias into its matmul via a constant-1 column in pad lane 96,
    * zero-pad 96 -> 128 so MXU tiles and output stores are lane-dense,
    * cast to the MXU dtype (bf16 by default; kernel accumulates in f32).
    """
    hi = jax.lax.Precision.HIGHEST
    wv, bv = params["value"]
    wfc, bfc = params["fc"]
    wr1, br1 = params["reg0"]
    wr2, br2 = params["reg2"]
    # torch Linear: y = x @ W.T + b.  Fold value then fc:
    #   fc(value(x)) = x @ (Wv.T @ Wfc.T) + (bv @ Wfc.T + bfc)
    w_vfc = jnp.dot(wv.T, wfc.T, precision=hi)
    b_vfc = jnp.dot(bv, wfc.T, precision=hi) + bfc

    D, P = INPUT_DIM, PAD_DIM
    w = jnp.zeros((3, P, P), jnp.float32)
    w = w.at[0, :D, :D].set(w_vfc)
    w = w.at[0, D, :D].set(b_vfc)     # bias via the constant-1 column of x2
    w = w.at[0, D, D].set(1.0)        # keep the 1-column alive in h0
    w = w.at[1, :D, :D].set(wr1.T)
    w = w.at[1, D, :D].set(br1)
    w = w.at[1, D, D].set(1.0)        # keep the 1-column alive in h1
    w = w.at[2, :D, :D].set(wr2.T)
    w = w.at[2, D, :D].set(br2)       # h2 pad cols stay 0 (needed for LN stats)
    return w.astype(mxu_dtype)


def interactive_mha(x1, x2, w_packed, *, block_b=None):
    B, D = x1.shape
    assert D == INPUT_DIM and x2.shape == (B, D)
    assert w_packed.shape == (3, PAD_DIM, PAD_DIM)
    P = PAD_DIM
    pad = P - D

    # Lane-dense padding (pure layout plumbing): x1 pad cols are zero; x2 gets
    # the constant-1 bias column at lane 96 and is cast to the MXU dtype.
    x1p = jnp.pad(x1.astype(jnp.float32), ((0, 0), (0, pad)))
    x2p = jnp.concatenate(
        [x2.astype(jnp.float32),
         jnp.ones((B, 1), jnp.float32),
         jnp.zeros((B, pad - 1), jnp.float32)],
        axis=1).astype(w_packed.dtype)

    if block_b is None:
        # Single grid step for small B: v5e/v6e have one TensorCore, so extra
        # grid steps are a sequential loop that just repeats the ~0.35us/step
        # overhead and re-pushes the 3 weight matrices through the MXU.  Only
        # tile the batch when per-block row counts are large enough to
        # amortize those costs (also when v7x megacore sharding pays off).
        block_b = B
        if B > 512:
            for cand in (2048, 1024, 512, 256):
                if B % cand == 0:
                    block_b = cand
                    break
    assert B % block_b == 0 and (block_b == B or block_b % 8 == 0)

    itemsize = jnp.dtype(w_packed.dtype).itemsize
    cost = pl.CostEstimate(
        flops=2 * 3 * B * P * P,
        transcendentals=B,                                   # rsqrt per row
        bytes_accessed=(B * P * 4                            # x1 (f32)
                        + B * P * itemsize                   # x2 (mxu dtype)
                        + B * P * 4                          # out (f32)
                        + 3 * P * P * itemsize))             # weights

    out_p = pl.pallas_call(
        _imha_kernel,
        out_shape=jax.ShapeDtypeStruct((B, P), jnp.float32),
        grid=(B // block_b,),
        in_specs=[
            pl.BlockSpec((block_b, P), lambda i: (i, 0)),    # x1 block (f32)
            pl.BlockSpec((block_b, P), lambda i: (i, 0)),    # x2 block (mxu dtype)
            pl.BlockSpec((3, P, P), lambda i: (0, 0, 0)),    # packed weights (resident)
        ],
        out_specs=pl.BlockSpec((block_b, P), lambda i: (i, 0)),
        compiler_params=pltpu.CompilerParams(dimension_semantics=("parallel",)),
        cost_estimate=cost,
    )(x1p, x2p, w_packed)
    # TODO(synk): on v7x, confirm ("parallel",) shards the multi-block grid
    # across both TensorCores; otherwise switch that axis to core-parallel
    # semantics (only relevant once B is large enough to be tiled at all).
    return out_p[:, :D].astype(x1.dtype)


def reference(x1, x2, params):
    """Pure-JAX literal transcription of the PyTorch forward, for verification."""
    B, D = x1.shape

    def linear(x, name):
        w, b = params[name]
        return x @ w.T + b

    q = linear(x1, "query").reshape(B, NUM_HEADS, -1, HEAD_DIM)
    k = linear(x2, "key").reshape(B, NUM_HEADS, -1, HEAD_DIM)
    v = linear(x2, "value").reshape(B, NUM_HEADS, -1, HEAD_DIM)
    scores = jnp.matmul(q, jnp.swapaxes(k, -2, -1)) / jnp.sqrt(jnp.float32(HEAD_DIM))
    w_attn = jax.nn.softmax(scores, axis=-1)
    attn = jnp.matmul(w_attn, v).reshape(B, -1)
    out = linear(attn, "fc")
    out = jax.nn.relu(linear(out, "reg0"))
    out = jax.nn.relu(linear(out, "reg2"))
    out = out + x1
    mean = out.mean(-1, keepdims=True)
    var = ((out - mean) ** 2).mean(-1, keepdims=True)
    return (out - mean) / jnp.sqrt(var + LN_EPS)


def init_params(key, dim):
    """Deterministic synthetic parameters (PyTorch Linear shapes: W (out,in), b (out,))."""
    params = {}
    names = ("query", "key", "value", "fc", "reg0", "reg2")
    keys = jax.random.split(key, 2 * len(names))
    bound = 1.0 / jnp.sqrt(jnp.float32(dim))
    for i, name in enumerate(names):
        w = jax.random.uniform(keys[2 * i], (dim, dim), jnp.float32, -bound, bound)
        b = jax.random.uniform(keys[2 * i + 1], (dim,), jnp.float32, -bound, bound)
        params[name] = (w, b)
    return params


if __name__ == "__main__":
    B = 16
    key = jax.random.PRNGKey(0)
    kp, k1, k2 = jax.random.split(key, 3)
    params = init_params(kp, INPUT_DIM)
    x1 = jax.random.normal(k1, (B, INPUT_DIM), jnp.float32)
    x2 = jax.random.normal(k2, (B, INPUT_DIM), jnp.float32)

    ref = jax.block_until_ready(reference(x1, x2, params))

    # f32 path: verifies the algebra (value->fc fold, bias-column fold,
    # 96->128 padding, fixed 1/96 LN divisor) at tight tolerance.
    w_f32 = prepare_params(params, mxu_dtype=jnp.float32)
    out_f32 = jax.block_until_ready(interactive_mha(x1, x2, w_f32))
    assert out_f32.shape == (B, INPUT_DIM)
    err32 = float(jnp.max(jnp.abs(out_f32 - ref)))
    assert jnp.allclose(out_f32, ref, atol=1e-4, rtol=1e-4), err32

    # bf16 path (production default): bf16 MXU operands, f32 accumulation.
    # Looser tolerance vs the pure-f32 reference to cover bf16 operand rounding.
    w_bf16 = prepare_params(params)  # mxu_dtype=jnp.bfloat16
    out_bf16 = jax.block_until_ready(interactive_mha(x1, x2, w_bf16))
    assert out_bf16.shape == (B, INPUT_DIM)
    err16 = float(jnp.max(jnp.abs(out_bf16 - ref)))
    assert jnp.allclose(out_bf16, ref, atol=3e-2, rtol=3e-2), err16

    print("KERNEL_OK")
</pallas_src>

<mosaic_0001>
module attributes {stable_mosaic.version = 11 : i64} {
  func.func @_imha_kernel(%arg0: i32, %arg1: memref<16x128xf32, #tpu.memory_space<vmem>>, %arg2: memref<16x128xf32, #tpu.memory_space<vmem>>, %arg3: memref<3x128x128xf32, #tpu.memory_space<vmem>>, %arg4: memref<16x128xf32, #tpu.memory_space<vmem>>) attributes {dimension_semantics = [#tpu.dimension_semantics<parallel>], iteration_bounds = array<i64: 1>, scalar_prefetch = 0 : i64, scratch_operands = 0 : i64, tpu.core_type = #tpu.core_type<tc>, window_params = [{transform_indices = @transform_0, window_bounds = array<i64: 16, 128>}, {transform_indices = @transform_1, window_bounds = array<i64: 16, 128>}, {pipeline_mode = #tpu.pipeline_mode<synchronous>, transform_indices = @transform_2, window_bounds = array<i64: 3, 128, 128>}, {transform_indices = @transform_3, window_bounds = array<i64: 16, 128>}]} {
    %c0 = arith.constant 0 : index
    %c0_0 = arith.constant 0 : index
    %0 = vector.load %arg1[%c0, %c0_0] : memref<16x128xf32, #tpu.memory_space<vmem>>, vector<16x128xf32>
    %c0_1 = arith.constant 0 : index
    %c0_2 = arith.constant 0 : index
    %1 = vector.load %arg2[%c0_1, %c0_2] : memref<16x128xf32, #tpu.memory_space<vmem>>, vector<16x128xf32>
    %c0_3 = arith.constant 0 : index
    %c0_4 = arith.constant 0 : index
    %c0_5 = arith.constant 0 : index
    %2 = vector.load %arg3[%c0_3, %c0_4, %c0_5] : memref<3x128x128xf32, #tpu.memory_space<vmem>>, vector<1x128x128xf32>
    %3 = vector.shape_cast %2 : vector<1x128x128xf32> to vector<128x128xf32>
    %cst = arith.constant dense<0.000000e+00> : vector<16x128xf32>
    %4 = tpu.matmul %1, %3, %cst {dimension_numbers = #tpu.dot_dimension_numbers<[1], [0], [0], [1], [0, 0, 1, 1], [], []>} : vector<16x128xf32>, vector<128x128xf32>, vector<16x128xf32> -> vector<16x128xf32>
    %c1 = arith.constant 1 : index
    %c0_6 = arith.constant 0 : index
    %c0_7 = arith.constant 0 : index
    %5 = vector.load %arg3[%c1, %c0_6, %c0_7] : memref<3x128x128xf32, #tpu.memory_space<vmem>>, vector<1x128x128xf32>
    %6 = vector.shape_cast %5 : vector<1x128x128xf32> to vector<128x128xf32>
    %cst_8 = arith.constant dense<0.000000e+00> : vector<16x128xf32>
    %7 = tpu.matmul %4, %6, %cst_8 {dimension_numbers = #tpu.dot_dimension_numbers<[1], [0], [0], [1], [0, 0, 1, 1], [], []>} : vector<16x128xf32>, vector<128x128xf32>, vector<16x128xf32> -> vector<16x128xf32>
    %cst_9 = arith.constant 0.000000e+00 : f32
    %8 = vector.broadcast %cst_9 : f32 to vector<16x128xf32>
    %9 = arith.maximumf %7, %8 : vector<16x128xf32>
    %c2 = arith.constant 2 : index
    %c0_10 = arith.constant 0 : index
    %c0_11 = arith.constant 0 : index
    %10 = vector.load %arg3[%c2, %c0_10, %c0_11] : memref<3x128x128xf32, #tpu.memory_space<vmem>>, vector<1x128x128xf32>
    %11 = vector.shape_cast %10 : vector<1x128x128xf32> to vector<128x128xf32>
    %cst_12 = arith.constant dense<0.000000e+00> : vector<16x128xf32>
    %12 = tpu.matmul %9, %11, %cst_12 {dimension_numbers = #tpu.dot_dimension_numbers<[1], [0], [0], [1], [0, 0, 1, 1], [], []>} : vector<16x128xf32>, vector<128x128xf32>, vector<16x128xf32> -> vector<16x128xf32>
    %cst_13 = arith.constant 0.000000e+00 : f32
    %13 = vector.broadcast %cst_13 : f32 to vector<16x128xf32>
    %14 = arith.maximumf %12, %13 : vector<16x128xf32>
    %15 = arith.addf %14, %0 : vector<16x128xf32>
    %cst_14 = arith.constant dense<0.000000e+00> : vector<16xf32>
    %16 = vector.multi_reduction <add>, %15, %cst_14 [1] : vector<16x128xf32> to vector<16xf32>
    %17 = vector.shape_cast %16 : vector<16xf32> to vector<16x1xf32>
    %cst_15 = arith.constant 0.010416667 : f32
    %18 = vector.broadcast %cst_15 : f32 to vector<16x1xf32>
    %19 = arith.mulf %17, %18 : vector<16x1xf32>
    %20 = arith.mulf %15, %15 : vector<16x128xf32>
    %cst_16 = arith.constant dense<0.000000e+00> : vector<16xf32>
    %21 = vector.multi_reduction <add>, %20, %cst_16 [1] : vector<16x128xf32> to vector<16xf32>
    %22 = vector.shape_cast %21 : vector<16xf32> to vector<16x1xf32>
    %cst_17 = arith.constant 0.010416667 : f32
    %23 = vector.broadcast %cst_17 : f32 to vector<16x1xf32>
    %24 = arith.mulf %22, %23 : vector<16x1xf32>
    %25 = arith.mulf %19, %19 : vector<16x1xf32>
    %26 = arith.subf %24, %25 : vector<16x1xf32>
    %cst_18 = arith.constant 0.000000e+00 : f32
    %27 = vector.broadcast %cst_18 : f32 to vector<16x1xf32>
    %28 = arith.maximumf %26, %27 : vector<16x1xf32>
    %29 = vector.broadcast %19 : vector<16x1xf32> to vector<16x128xf32>
    %30 = arith.subf %15, %29 : vector<16x128xf32>
    %cst_19 = arith.constant 9.99999974E-6 : f32
    %31 = vector.broadcast %cst_19 : f32 to vector<16x1xf32>
    %32 = arith.addf %28, %31 : vector<16x1xf32>
    %33 = math.rsqrt %32 : vector<16x1xf32>
    %34 = vector.broadcast %33 : vector<16x1xf32> to vector<16x128xf32>
    %35 = arith.mulf %30, %34 : vector<16x128xf32>
    %c0_20 = arith.constant 0 : index
    %c0_21 = arith.constant 0 : index
    %36 = vector.load %arg4[%c0_20, %c0_21] : memref<16x128xf32, #tpu.memory_space<vmem>>, vector<16x128xf32>
    tpu.vector_store %arg4[%c0_20, %c0_21], %35 {strides = array<i32>} : memref<16x128xf32, #tpu.memory_space<vmem>>, vector<16x128xf32>,
    return
  }
  func.func @transform_0(%arg0: i32) -> (i32, i32) {
    %c0_i32 = arith.constant 0 : i32
    %c0_i32_0 = arith.constant 0 : i32
    return %arg0, %c0_i32 : i32, i32
  }
  func.func @transform_1(%arg0: i32) -> (i32, i32) {
    %c0_i32 = arith.constant 0 : i32
    %c0_i32_0 = arith.constant 0 : i32
    return %arg0, %c0_i32 : i32, i32
  }
  func.func @transform_2(%arg0: i32) -> (i32, i32, i32) {
    %c0_i32 = arith.constant 0 : i32
    %c0_i32_0 = arith.constant 0 : i32
    %c0_i32_1 = arith.constant 0 : i32
    %c0_i32_2 = arith.constant 0 : i32
    return %c0_i32, %c0_i32_0, %c0_i32_1 : i32, i32, i32
  }
  func.func @transform_3(%arg0: i32) -> (i32, i32) {
    %c0_i32 = arith.constant 0 : i32
    %c0_i32_0 = arith.constant 0 : i32
    return %arg0, %c0_i32 : i32, i32
  }
}

</mosaic_0001>

<llo_original>
// kernel: tpu_custom_call.1
$region0: #{tpu_custom_call.1}
  #allocation0 [shape = 'u32[]', space=smem, size = 0x4, offset = 0x4, fixed_abs, tag = 'smem constant byte address 0x4 - core index']
  #allocation1 [shape = 'u32[144,128]{1,0:T(1,128)}', space=vmem, size = 0x12000, scoped, tag = 'internal scratch']
  %s0 = inlined_call_operand.hbm [shape: f32[16,128], index: 0, kind: input, shape index: {}]
  %s1 = inlined_call_operand.hbm [shape: f32[16,128], index: 1, kind: input, shape index: {}]
  %s2 = inlined_call_operand.hbm [shape: f32[3,128,128], index: 2, kind: input, shape index: {}]
  %s3 = inlined_call_operand.hbm [shape: f32[16,128], index: 3, kind: output, shape index: {}]
  %s4 = sld [smem:[#allocation0]]
  $region34: #{tpu_custom_call.1} parent=0
    _
  %s6 = ssub.s32 1, %s4
  %s7 = scalar_select 0, %s6, %s4
  $region1: #{tpu_custom_call.1} parent=0
    #allocation2 [shape = 'u8[8192]{0}', space=vmem, size = 0x2000, scoped, tag = 'input window, operand 0, single buffered']
    #allocation3 [shape = 's32[1]{0}', space=sflag, size = 0x4, scoped, tag = 'scoped memory for tpu_custom_call.1']
    #allocation4 [shape = 's32[1]{0}', space=sflag, size = 0x4, scoped, tag = 'scoped memory for tpu_custom_call.1']
    #allocation5 [shape = 'u8[8192]{0}', space=vmem, size = 0x2000, scoped, tag = 'input window, operand 1, single buffered']
    #allocation6 [shape = 's32[1]{0}', space=sflag, size = 0x4, scoped, tag = 'scoped memory for tpu_custom_call.1']
    #allocation7 [shape = 'u8[196608]{0}', space=vmem, size = 0x30000, scoped, tag = 'input window, operand 2, single buffered']
    #allocation8 [shape = 'u8[8192]{0}', space=vmem, size = 0x2000, scoped, tag = 'output window, operand 0, single buffered']
    %8 = vsyncpa [#allocation3], 0
    %9 = vsyncpa [#allocation6], 0
    %10 = vsyncpa [#allocation4], 0
    // Predicated region
    $region2: #{tpu_custom_call.1} parent=1 // pred_check
      _
    $region3: #{tpu_custom_call.1} parent=1 // pred_check_branch
      %12 = sbr.rel (0) target = $region5
    $region4: #{tpu_custom_call.1} parent=1 // pred_region
      %s14 = ssub.s32 256, 256
      %15 = vsyncadd [#allocation3], %s14
      %s16 = sshll.u32 [#allocation2], 4
      %s17 = int_to_ptr.vmem [resolvable:$true] %s16
      %22 = dma.hbm_to_vmem [thread:$0]  %s0, 256, %s17, [#allocation3], 128, 128, 8
    $region5: #{tpu_custom_call.1} parent=1 // pred_fallthru
      _
    // Predicated region
    $region6: #{tpu_custom_call.1} parent=1 // pred_check
      _
    $region7: #{tpu_custom_call.1} parent=1 // pred_check_branch
      %24 = sbr.rel (0) target = $region9
    $region8: #{tpu_custom_call.1} parent=1 // pred_region
      %s26 = ssub.s32 256, 256
      %27 = vsyncadd [#allocation6], %s26
      %s28 = sshll.u32 [#allocation5], 4
      %s29 = int_to_ptr.vmem [resolvable:$true] %s28
      %34 = dma.hbm_to_vmem [thread:$0]  %s1, 256, %s29, [#allocation6], 128, 128, 8
    $region9: #{tpu_custom_call.1} parent=1 // pred_fallthru
      _
    // Predicated region
    $region10: #{tpu_custom_call.1} parent=1 // pred_check
      _
    $region11: #{tpu_custom_call.1} parent=1 // pred_check_branch
      %36 = sbr.rel (0) target = $region13
    $region12: #{tpu_custom_call.1} parent=1 // pred_region
      %s38 = ssub.s32 6144, 6144
      %39 = vsyncadd [#allocation6], %s38
      %s40 = sshll.u32 [#allocation7], 4
      %s41 = int_to_ptr.vmem [resolvable:$true] %s40
      %46 = dma.hbm_to_vmem [thread:$0]  %s2, 6144, %s41, [#allocation6], 128, 128, 8
    $region13: #{tpu_custom_call.1} parent=1 // pred_fallthru
      _
    // Predicated region
    $region14: #{tpu_custom_call.1} parent=1 // pred_check
      _
    $region15: #{tpu_custom_call.1} parent=1 // pred_check_branch
      %48 = sbr.rel (0) target = $region17
    $region16: #{tpu_custom_call.1} parent=1 // pred_region
      %49 = dma.done [#allocation3], 256
    $region17: #{tpu_custom_call.1} parent=1 // pred_fallthru
      _
    // Predicated region
    $region18: #{tpu_custom_call.1} parent=1 // pred_check
      _
    $region19: #{tpu_custom_call.1} parent=1 // pred_check_branch
      %51 = sbr.rel (0) target = $region21
    $region20: #{tpu_custom_call.1} parent=1 // pred_region
      %52 = dma.done [#allocation6], 256
    $region21: #{tpu_custom_call.1} parent=1 // pred_fallthru
      _
    // Predicated region
    $region22: #{tpu_custom_call.1} parent=1 // pred_check
      _
    $region23: #{tpu_custom_call.1} parent=1 // pred_check_branch
      %54 = sbr.rel (0) target = $region25
    $region24: #{tpu_custom_call.1} parent=1 // pred_region
      %55 = dma.done [#allocation6], 6144
    $region25: #{tpu_custom_call.1} parent=1 // pred_fallthru
      _
    %v56 = vld [vmem:[#allocation2] sm:$0xff]
    %v57 = vld [vmem:[#allocation2 + $0x8] sm:$0xff]
    %v58 = vld [vmem:[#allocation5] sm:$0xff]
    %v59 = vld [vmem:[#allocation5 + $0x8] sm:$0xff]
    %v60 = vld [vmem:[#allocation7] sm:$0xff]
    %v61 = vld [vmem:[#allocation7 + $0x8] sm:$0xff]
    %v62 = vld [vmem:[#allocation7 + $0x10] sm:$0xff]
    %v63 = vld [vmem:[#allocation7 + $0x18] sm:$0xff]
    %v64 = vld [vmem:[#allocation7 + $0x20] sm:$0xff]
    %v65 = vld [vmem:[#allocation7 + $0x28] sm:$0xff]
    %v66 = vld [vmem:[#allocation7 + $0x30] sm:$0xff]
    %v67 = vld [vmem:[#allocation7 + $0x38] sm:$0xff]
    %v68 = vld [vmem:[#allocation7 + $0x40] sm:$0xff]
    %v69 = vld [vmem:[#allocation7 + $0x48] sm:$0xff]
    %v70 = vld [vmem:[#allocation7 + $0x50] sm:$0xff]
    %v71 = vld [vmem:[#allocation7 + $0x58] sm:$0xff]
    %v72 = vld [vmem:[#allocation7 + $0x60] sm:$0xff]
    %v73 = vld [vmem:[#allocation7 + $0x68] sm:$0xff]
    %v74 = vld [vmem:[#allocation7 + $0x70] sm:$0xff]
    %v75 = vld [vmem:[#allocation7 + $0x78] sm:$0xff]
    %76 = vmatprep.subr.mxu0 0.0
    %77 = vmatpush1.msra.mxu0 %v60
    %78 = vmatprep.subr.mxu0 0.0
    %79 = vmatpush1.msra.mxu0 %v61
    %80 = vmatprep.subr.mxu0 0.0
    %81 = vmatpush1.msra.mxu0 %v62
    %82 = vmatprep.subr.mxu0 0.0
    %83 = vmatpush1.msra.mxu0 %v63
    %84 = vmatprep.subr.mxu0 0.0
    %85 = vmatpush1.msra.mxu0 %v64
    %86 = vmatprep.subr.mxu0 0.0
    %87 = vmatpush1.msra.mxu0 %v65
    %88 = vmatprep.subr.mxu0 0.0
    %89 = vmatpush1.msra.mxu0 %v66
    %90 = vmatprep.subr.mxu0 0.0
    %91 = vmatpush1.msra.mxu0 %v67
    %92 = vmatprep.subr.mxu0 0.0
    %93 = vmatpush1.msra.mxu0 %v68
    %94 = vmatprep.subr.mxu0 0.0
    %95 = vmatpush1.msra.mxu0 %v69
    %96 = vmatprep.subr.mxu0 0.0
    %97 = vmatpush1.msra.mxu0 %v70
    %98 = vmatprep.subr.mxu0 0.0
    %99 = vmatpush1.msra.mxu0 %v71
    %100 = vmatprep.subr.mxu0 0.0
    %101 = vmatpush1.msra.mxu0 %v72
    %102 = vmatprep.subr.mxu0 0.0
    %103 = vmatpush1.msra.mxu0 %v73
    %104 = vmatprep.subr.mxu0 0.0
    %105 = vmatpush1.msra.mxu0 %v74
    %106 = vmatprep.subr.mxu0 0.0
    %107 = vmatpush1.msra.mxu0 %v75
    %108 = vmatprep.subr.mxu0 0.0
    %109 = vmatpush1.msra.mxu0 0.0
    %110 = vmatprep.subr.mxu0 0.0
    %111 = vmatpush1.msra.mxu0 0.0
    %112 = vmatprep.subr.mxu0 0.0
    %113 = vmatpush1.msra.mxu0 0.0
    %114 = vmatprep.subr.mxu0 0.0
    %115 = vmatpush1.msra.mxu0 0.0
    %116 = vmatprep.subr.mxu0 0.0
    %117 = vmatpush1.msra.mxu0 0.0
    %118 = vmatprep.subr.mxu0 0.0
    %119 = vmatpush1.msra.mxu0 0.0
    %120 = vmatprep.subr.mxu0 0.0
    %121 = vmatpush1.msra.mxu0 0.0
    %122 = vmatprep.subr.mxu0 0.0
    %123 = vmatpush1.msra.mxu0 0.0
    %124 = vmatprep.subr.mxu0 0.0
    %125 = vmatpush1.msra.mxu0 0.0
    %126 = vmatprep.subr.mxu0 0.0
    %127 = vmatpush1.msra.mxu0 0.0
    %128 = vmatprep.subr.mxu0 0.0
    %129 = vmatpush1.msra.mxu0 0.0
    %130 = vmatprep.subr.mxu0 0.0
    %131 = vmatpush1.msra.mxu0 0.0
    %132 = vmatprep.subr.mxu0 0.0
    %133 = vmatpush1.msra.mxu0 0.0
    %134 = vmatprep.subr.mxu0 0.0
    %135 = vmatpush1.msra.mxu0 0.0
    %136 = vmatprep.subr.mxu0 0.0
    %137 = vmatpush1.msra.mxu0 0.0
    %138 = vmatprep.subr.mxu0 0.0
    %139 = vmatpush1.msra.mxu0 0.0
    %140 = vmatprep.mubr.f32.mxu0 0.0
    %141 = vmatmul.mubr.f32.gmra.mrb[0].mxu0 %v58
    %v142 = vpop.f32.mrb[0].mxu0
    %v143 = vadd.f32 0.0, %v142
    %v144 = vpop.f32.mrb[0].mxu0
    %145 = vmatprep.mubr.f32.mxu0 0.0
    %146 = vmatmul.mubr.f32.gmra.mrb[0].mxu0 %v59
    %v147 = vpop.f32.mrb[0].mxu0
    %v148 = vadd.f32 0.0, %v147
    %v149 = vpop.f32.mrb[0].mxu0
    %150 = vdwg.mxu0
    %s151 = scalar_lea.vmem [#allocation7], 128
    %v152 = vld [vmem:[%s151] sm:$0xff]
    %v153 = vld [vmem:[%s151 + $0x8] sm:$0xff]
    %v154 = vld [vmem:[%s151 + $0x10] sm:$0xff]
    %v155 = vld [vmem:[%s151 + $0x18] sm:$0xff]
    %v156 = vld [vmem:[%s151 + $0x20] sm:$0xff]
    %v157 = vld [vmem:[%s151 + $0x28] sm:$0xff]
    %v158 = vld [vmem:[%s151 + $0x30] sm:$0xff]
    %v159 = vld [vmem:[%s151 + $0x38] sm:$0xff]
    %v160 = vld [vmem:[%s151 + $0x40] sm:$0xff]
    %v161 = vld [vmem:[%s151 + $0x48] sm:$0xff]
    %v162 = vld [vmem:[%s151 + $0x50] sm:$0xff]
    %v163 = vld [vmem:[%s151 + $0x58] sm:$0xff]
    %v164 = vld [vmem:[%s151 + $0x60] sm:$0xff]
    %v165 = vld [vmem:[%s151 + $0x68] sm:$0xff]
    %v166 = vld [vmem:[%s151 + $0x70] sm:$0xff]
    %v167 = vld [vmem:[%s151 + $0x78] sm:$0xff]
    %168 = vmatprep.subr.mxu0 0.0
    %169 = vmatpush1.msra.mxu0 %v152
    %170 = vmatprep.subr.mxu0 0.0
    %171 = vmatpush1.msra.mxu0 %v153
    %172 = vmatprep.subr.mxu0 0.0
    %173 = vmatpush1.msra.mxu0 %v154
    %174 = vmatprep.subr.mxu0 0.0
    %175 = vmatpush1.msra.mxu0 %v155
    %176 = vmatprep.subr.mxu0 0.0
    %177 = vmatpush1.msra.mxu0 %v156
    %178 = vmatprep.subr.mxu0 0.0
    %179 = vmatpush1.msra.mxu0 %v157
    %180 = vmatprep.subr.mxu0 0.0
    %181 = vmatpush1.msra.mxu0 %v158
    %182 = vmatprep.subr.mxu0 0.0
    %183 = vmatpush1.msra.mxu0 %v159
    %184 = vmatprep.subr.mxu0 0.0
    %185 = vmatpush1.msra.mxu0 %v160
    %186 = vmatprep.subr.mxu0 0.0
    %187 = vmatpush1.msra.mxu0 %v161
    %188 = vmatprep.subr.mxu0 0.0
    %189 = vmatpush1.msra.mxu0 %v162
    %190 = vmatprep.subr.mxu0 0.0
    %191 = vmatpush1.msra.mxu0 %v163
    %192 = vmatprep.subr.mxu0 0.0
    %193 = vmatpush1.msra.mxu0 %v164
    %194 = vmatprep.subr.mxu0 0.0
    %195 = vmatpush1.msra.mxu0 %v165
    %196 = vmatprep.subr.mxu0 0.0
    %197 = vmatpush1.msra.mxu0 %v166
    %198 = vmatprep.subr.mxu0 0.0
    %199 = vmatpush1.msra.mxu0 %v167
    %200 = vmatprep.subr.mxu0 0.0
    %201 = vmatpush1.msra.mxu0 0.0
    %202 = vmatprep.subr.mxu0 0.0
    %203 = vmatpush1.msra.mxu0 0.0
    %204 = vmatprep.subr.mxu0 0.0
    %205 = vmatpush1.msra.mxu0 0.0
    %206 = vmatprep.subr.mxu0 0.0
    %207 = vmatpush1.msra.mxu0 0.0
    %208 = vmatprep.subr.mxu0 0.0
    %209 = vmatpush1.msra.mxu0 0.0
    %210 = vmatprep.subr.mxu0 0.0
    %211 = vmatpush1.msra.mxu0 0.0
    %212 = vmatprep.subr.mxu0 0.0
    %213 = vmatpush1.msra.mxu0 0.0
    %214 = vmatprep.subr.mxu0 0.0
    %215 = vmatpush1.msra.mxu0 0.0
    %216 = vmatprep.subr.mxu0 0.0
    %217 = vmatpush1.msra.mxu0 0.0
    %218 = vmatprep.subr.mxu0 0.0
    %219 = vmatpush1.msra.mxu0 0.0
    %220 = vmatprep.subr.mxu0 0.0
    %221 = vmatpush1.msra.mxu0 0.0
    %222 = vmatprep.subr.mxu0 0.0
    %223 = vmatpush1.msra.mxu0 0.0
    %224 = vmatprep.subr.mxu0 0.0
    %225 = vmatpush1.msra.mxu0 0.0
    %226 = vmatprep.subr.mxu0 0.0
    %227 = vmatpush1.msra.mxu0 0.0
    %228 = vmatprep.subr.mxu0 0.0
    %229 = vmatpush1.msra.mxu0 0.0
    %230 = vmatprep.subr.mxu0 0.0
    %231 = vmatpush1.msra.mxu0 0.0
    %232 = vmatprep.mubr.f32.mxu0 0.0
    %233 = vmatmul.mubr.f32.gmra.mrb[0].mxu0 %v143
    %v234 = vpop.f32.mrb[0].mxu0
    %v235 = vadd.f32 0.0, %v234
    %v236 = vpop.f32.mrb[0].mxu0
    %237 = vmatprep.mubr.f32.mxu0 0.0
    %238 = vmatmul.mubr.f32.gmra.mrb[0].mxu0 %v148
    %v239 = vpop.f32.mrb[0].mxu0
    %v240 = vadd.f32 0.0, %v239
    %v241 = vpop.f32.mrb[0].mxu0
    %242 = vdwg.mxu0
    %v243 = vmax.f32 %v235, 0.0
    %v244 = vmax.f32 %v240, 0.0
    %s245 = scalar_lea.vmem [#allocation7], 256
    %v246 = vld [vmem:[%s245] sm:$0xff]
    %v247 = vld [vmem:[%s245 + $0x8] sm:$0xff]
    %v248 = vld [vmem:[%s245 + $0x10] sm:$0xff]
    %v249 = vld [vmem:[%s245 + $0x18] sm:$0xff]
    %v250 = vld [vmem:[%s245 + $0x20] sm:$0xff]
    %v251 = vld [vmem:[%s245 + $0x28] sm:$0xff]
    %v252 = vld [vmem:[%s245 + $0x30] sm:$0xff]
    %v253 = vld [vmem:[%s245 + $0x38] sm:$0xff]
    %v254 = vld [vmem:[%s245 + $0x40] sm:$0xff]
    %v255 = vld [vmem:[%s245 + $0x48] sm:$0xff]
    %v256 = vld [vmem:[%s245 + $0x50] sm:$0xff]
    %v257 = vld [vmem:[%s245 + $0x58] sm:$0xff]
    %v258 = vld [vmem:[%s245 + $0x60] sm:$0xff]
    %v259 = vld [vmem:[%s245 + $0x68] sm:$0xff]
    %v260 = vld [vmem:[%s245 + $0x70] sm:$0xff]
    %v261 = vld [vmem:[%s245 + $0x78] sm:$0xff]
    %262 = vmatprep.subr.mxu0 0.0
    %263 = vmatpush1.msra.mxu0 %v246
    %264 = vmatprep.subr.mxu0 0.0
    %265 = vmatpush1.msra.mxu0 %v247
    %266 = vmatprep.subr.mxu0 0.0
    %267 = vmatpush1.msra.mxu0 %v248
    %268 = vmatprep.subr.mxu0 0.0
    %269 = vmatpush1.msra.mxu0 %v249
    %270 = vmatprep.subr.mxu0 0.0
    %271 = vmatpush1.msra.mxu0 %v250
    %272 = vmatprep.subr.mxu0 0.0
    %273 = vmatpush1.msra.mxu0 %v251
    %274 = vmatprep.subr.mxu0 0.0
    %275 = vmatpush1.msra.mxu0 %v252
    %276 = vmatprep.subr.mxu0 0.0
    %277 = vmatpush1.msra.mxu0 %v253
    %278 = vmatprep.subr.mxu0 0.0
    %279 = vmatpush1.msra.mxu0 %v254
    %280 = vmatprep.subr.mxu0 0.0
    %281 = vmatpush1.msra.mxu0 %v255
    %282 = vmatprep.subr.mxu0 0.0
    %283 = vmatpush1.msra.mxu0 %v256
    %284 = vmatprep.subr.mxu0 0.0
    %285 = vmatpush1.msra.mxu0 %v257
    %286 = vmatprep.subr.mxu0 0.0
    %287 = vmatpush1.msra.mxu0 %v258
    %288 = vmatprep.subr.mxu0 0.0
    %289 = vmatpush1.msra.mxu0 %v259
    %290 = vmatprep.subr.mxu0 0.0
    %291 = vmatpush1.msra.mxu0 %v260
    %292 = vmatprep.subr.mxu0 0.0
    %293 = vmatpush1.msra.mxu0 %v261
    %294 = vmatprep.subr.mxu0 0.0
    %295 = vmatpush1.msra.mxu0 0.0
    %296 = vmatprep.subr.mxu0 0.0
    %297 = vmatpush1.msra.mxu0 0.0
    %298 = vmatprep.subr.mxu0 0.0
    %299 = vmatpush1.msra.mxu0 0.0
    %300 = vmatprep.subr.mxu0 0.0
    %301 = vmatpush1.msra.mxu0 0.0
    %302 = vmatprep.subr.mxu0 0.0
    %303 = vmatpush1.msra.mxu0 0.0
    %304 = vmatprep.subr.mxu0 0.0
    %305 = vmatpush1.msra.mxu0 0.0
    %306 = vmatprep.subr.mxu0 0.0
    %307 = vmatpush1.msra.mxu0 0.0
    %308 = vmatprep.subr.mxu0 0.0
    %309 = vmatpush1.msra.mxu0 0.0
    %310 = vmatprep.subr.mxu0 0.0
    %311 = vmatpush1.msra.mxu0 0.0
    %312 = vmatprep.subr.mxu0 0.0
    %313 = vmatpush1.msra.mxu0 0.0
    %314 = vmatprep.subr.mxu0 0.0
    %315 = vmatpush1.msra.mxu0 0.0
    %316 = vmatprep.subr.mxu0 0.0
    %317 = vmatpush1.msra.mxu0 0.0
    %318 = vmatprep.subr.mxu0 0.0
    %319 = vmatpush1.msra.mxu0 0.0
    %320 = vmatprep.subr.mxu0 0.0
    %321 = vmatpush1.msra.mxu0 0.0
    %322 = vmatprep.subr.mxu0 0.0
    %323 = vmatpush1.msra.mxu0 0.0
    %324 = vmatprep.subr.mxu0 0.0
    %325 = vmatpush1.msra.mxu0 0.0
    %326 = vmatprep.mubr.f32.mxu0 0.0
    %327 = vmatmul.mubr.f32.gmra.mrb[0].mxu0 %v243
    %v328 = vpop.f32.mrb[0].mxu0
    %v329 = vadd.f32 0.0, %v328
    %v330 = vpop.f32.mrb[0].mxu0
    %331 = vmatprep.mubr.f32.mxu0 0.0
    %332 = vmatmul.mubr.f32.gmra.mrb[0].mxu0 %v244
    %v333 = vpop.f32.mrb[0].mxu0
    %v334 = vadd.f32 0.0, %v333
    %v335 = vpop.f32.mrb[0].mxu0
    %336 = vdwg.mxu0
    %v337 = vmax.f32 %v329, 0.0
    %v338 = vmax.f32 %v334, 0.0
    %v339 = vadd.f32 %v337, %v56
    %v340 = vadd.f32 %v338, %v57
    %341 = vadd.xlane.f32.xlu0 %v339
    %v342 = vpop.xlane.xlu0 %341
    %343 = vadd.xlane.f32.xlu0 %v340
    %v344 = vpop.xlane.xlu0 %343
    %v345 = vmul.f32 %v342, 0.010416667
    %v346 = vmul.f32 %v344, 0.010416667
    %v347 = vmul.f32 %v339, %v339
    %v348 = vmul.f32 %v340, %v340
    %349 = vadd.xlane.f32.xlu0 %v347
    %v350 = vpop.xlane.xlu0 %349
    %351 = vadd.xlane.f32.xlu0 %v348
    %v352 = vpop.xlane.xlu0 %351
    %v353 = vmul.f32 %v350, 0.010416667
    %v354 = vmul.f32 %v352, 0.010416667
    %v355 = vmul.f32 %v345, %v345
    %v356 = vmul.f32 %v346, %v346
    %v357 = vsub.f32 %v353, %v355
    %v358 = vsub.f32 %v354, %v356
    %v359 = vmax.f32 %v357, 0.0
    %v360 = vmax.f32 %v358, 0.0
    %v361 = vsub.f32 %v339, %v345
    %v362 = vsub.f32 %v340, %v346
    %v363 = vadd.f32 %v359, 1e-05
    %v364 = vadd.f32 %v360, 1e-05
    %v365 = vrsqrt.pop %v363
    %v366 = vrsqrt.pop %v364
    %v367 = vmul.f32 %v361, %v365
    %v368 = vmul.f32 %v362, %v366
    %369 = vst [vmem:[#allocation8] sm:$0xff] %v367
    %370 = vst [vmem:[#allocation8 + $0x8] sm:$0xff] %v368
    // Predicated region
    $region26: #{tpu_custom_call.1} parent=1 // pred_check
      _
    $region27: #{tpu_custom_call.1} parent=1 // pred_check_branch
      %372 = sbr.rel (0) target = $region29
    $region28: #{tpu_custom_call.1} parent=1 // pred_region
      %s374 = ssub.s32 256, 256
      %375 = vsyncadd [#allocation4], %s374
      %s376 = sshll.u32 [#allocation8], 4
      %s377 = int_to_ptr.vmem [resolvable:$true] %s376
      %382 = dma.vmem_to_hbm [thread:$0]  %s377, 256, %s3, [#allocation4], 128, 128, 8
    $region29: #{tpu_custom_call.1} parent=1 // pred_fallthru
      _
    // Predicated region
    $region30: #{tpu_custom_call.1} parent=1 // pred_check
      _
    $region31: #{tpu_custom_call.1} parent=1 // pred_check_branch
      %384 = sbr.rel (0) target = $region33
    $region32: #{tpu_custom_call.1} parent=1 // pred_region
      %385 = dma.done [#allocation4], 256
    $region33: #{tpu_custom_call.1} parent=1 // pred_fallthru
      _
    %386 = vsyncpa [#allocation3], 1
    %387 = vsyncpa [#allocation6], 1
    %388 = vsyncpa [#allocation4], 1

</llo_original>
